<compile_context>
chip_gen: v5e
topology: v5e:2x2
jax: 0.10.0
libtpu: 0.0.40
codegen_flags: <defaults>
</compile_context>

<pallas_src>
import jax
import jax.numpy as jnp
from jax.experimental import pallas as pl
from jax.experimental.pallas import tpu as pltpu

INPUT_SIZE = 57
HIDDEN = 64
OUT = 18
LANE = 128                      # per-gate lane-block width
NEG_BIG = -1e30                 # mask value for padded logit lanes


def lstm_kernel(xc_ref, wg_ref, bg_ref, wl_ref, out_ref):
    """xc: (B, 256) = [x|h|pad , c|pad]; wg: (128, 512); bg: (1, 512);
    wl: (128, 128) (row 64 = linear bias); out: (B, 384) = [hn | cn | logp]."""
    xc = xc_ref[...]                       # (B, 256), f32
    xh = xc[:, 0:LANE]                     # (B, 128)  [x(57) | h(64) | 0]
    c = xc[:, LANE:2 * LANE]               # (B, 128)  [c(64) | 0]

    # One fused MXU matmul: gate g lives in lanes [g*128, g*128+64).
    gates = (jnp.dot(xh, wg_ref[...], preferred_element_type=jnp.float32)
             + bg_ref[...])                # (B, 512)

    i_g = jax.nn.sigmoid(gates[:, 0 * LANE:1 * LANE])
    f_g = jax.nn.sigmoid(gates[:, 1 * LANE:2 * LANE])
    g_g = jnp.tanh(gates[:, 2 * LANE:3 * LANE])
    o_g = jax.nn.sigmoid(gates[:, 3 * LANE:4 * LANE])

    # Padded lanes stay exactly 0: 0.5*0 + 0.5*tanh(0) = 0, 0.5*tanh(0) = 0.
    cn = f_g * c + i_g * g_g               # (B, 128)
    hn = o_g * jnp.tanh(cn)                # (B, 128)

    # Linear(64 -> 18) + LogSoftmax.  Lane HIDDEN (=64) carries a constant 1.0
    # so the bias row stored in wl row 64 is added by the same matmul.
    b = hn.shape[0]
    lane = jax.lax.broadcasted_iota(jnp.int32, (b, LANE), 1)
    hn_ext = jnp.where(lane == HIDDEN, jnp.float32(1.0), hn)
    logits = jnp.dot(hn_ext, wl_ref[...], preferred_element_type=jnp.float32)
    logits = jnp.where(lane < OUT, logits, jnp.float32(NEG_BIG))
    m = jnp.max(logits, axis=-1, keepdims=True)
    lse = m + jnp.log(jnp.sum(jnp.exp(logits - m), axis=-1, keepdims=True))
    logp = logits - lse                    # (B, 128), lanes >= OUT are garbage

    # Single lane-dense output slab; all stores 128-aligned and unmasked.
    out_ref[:, 0 * LANE:1 * LANE] = hn
    out_ref[:, 1 * LANE:2 * LANE] = cn
    out_ref[:, 2 * LANE:3 * LANE] = logp


def init_params(key):
    """Raw PyTorch-shaped parameters for nn.LSTM(57,64,1) + Linear(64,18)."""
    k = jax.random.split(key, 6)
    bound = 1.0 / jnp.sqrt(jnp.float32(HIDDEN))
    return {
        "w_ih": jax.random.uniform(k[0], (4 * HIDDEN, INPUT_SIZE), jnp.float32, -bound, bound),
        "w_hh": jax.random.uniform(k[1], (4 * HIDDEN, HIDDEN), jnp.float32, -bound, bound),
        "b_ih": jax.random.uniform(k[2], (4 * HIDDEN,), jnp.float32, -bound, bound),
        "b_hh": jax.random.uniform(k[3], (4 * HIDDEN,), jnp.float32, -bound, bound),
        "w_l": jax.random.uniform(k[4], (OUT, HIDDEN), jnp.float32, -bound, bound),
        "b_l": jax.random.uniform(k[5], (OUT,), jnp.float32, -bound, bound),
    }


def pack_params(params):
    """One-time packing into the fused / lane-padded kernel layout."""
    w_ih, w_hh = params["w_ih"], params["w_hh"]
    b = params["b_ih"] + params["b_hh"]

    w_gates = jnp.zeros((LANE, 4 * LANE), jnp.float32)
    b_gates = jnp.zeros((1, 4 * LANE), jnp.float32)
    for g in range(4):  # PyTorch gate order [i, f, g, o]
        wi_t = w_ih[g * HIDDEN:(g + 1) * HIDDEN, :].T      # (57, 64)
        wh_t = w_hh[g * HIDDEN:(g + 1) * HIDDEN, :].T      # (64, 64)
        col = g * LANE
        w_gates = w_gates.at[:INPUT_SIZE, col:col + HIDDEN].set(wi_t)
        w_gates = w_gates.at[INPUT_SIZE:INPUT_SIZE + HIDDEN, col:col + HIDDEN].set(wh_t)
        b_gates = b_gates.at[0, col:col + HIDDEN].set(b[g * HIDDEN:(g + 1) * HIDDEN])

    w_lin = jnp.zeros((LANE, LANE), jnp.float32)
    w_lin = w_lin.at[:HIDDEN, :OUT].set(params["w_l"].T)   # (64, 18)
    w_lin = w_lin.at[HIDDEN, :OUT].set(params["b_l"])      # bias row (lane 64 = 1.0)
    return {"w_gates": w_gates, "b_gates": b_gates, "w_lin": w_lin}


@jax.jit
def lstm_forward(x, h, c, packed):
    """x: (B, 57); h, c: (1, B, 64) -> (logp (1,B,18), hn (1,B,64), cn (1,B,64))."""
    B = x.shape[0]
    h2 = h.reshape(B, HIDDEN)
    c2 = c.reshape(B, HIDDEN)

    # Single lane-dense input slab: [x | h | 0] in lanes 0..127, [c | 0] in 128..255.
    xc = jnp.zeros((B, 2 * LANE), jnp.float32)
    xc = xc.at[:, :INPUT_SIZE].set(x)
    xc = xc.at[:, INPUT_SIZE:INPUT_SIZE + HIDDEN].set(h2)
    xc = xc.at[:, LANE:LANE + HIDDEN].set(c2)

    bytes_accessed = 4 * (B * 2 * LANE + LANE * 4 * LANE + 4 * LANE
                          + LANE * LANE + B * 3 * LANE)
    cost = pl.CostEstimate(
        flops=2 * B * LANE * 4 * LANE + 2 * B * LANE * LANE,
        transcendentals=6 * B * LANE,
        bytes_accessed=bytes_accessed,
    )

    vmem = pl.BlockSpec(memory_space=pltpu.MemorySpace.VMEM)
    out = pl.pallas_call(
        lstm_kernel,
        out_shape=jax.ShapeDtypeStruct((B, 3 * LANE), jnp.float32),
        in_specs=[vmem, vmem, vmem, vmem],
        out_specs=vmem,
        cost_estimate=cost,
    )(xc, packed["w_gates"], packed["b_gates"], packed["w_lin"])

    hn = out[:, 0 * LANE:0 * LANE + HIDDEN]
    cn = out[:, 1 * LANE:1 * LANE + HIDDEN]
    logp = out[:, 2 * LANE:2 * LANE + OUT]
    # x.unsqueeze(0) in PyTorch => seq_len = 1; rr carries that leading dim.
    return (logp.reshape(1, B, OUT),
            hn.reshape(1, B, HIDDEN),
            cn.reshape(1, B, HIDDEN))


def reference_forward(x, h, c, params):
    """Pure-JAX reference of the PyTorch forward for correctness checking."""
    B = x.shape[0]
    h2 = h.reshape(B, HIDDEN)
    c2 = c.reshape(B, HIDDEN)
    gates = x @ params["w_ih"].T + h2 @ params["w_hh"].T + (params["b_ih"] + params["b_hh"])
    i_g = jax.nn.sigmoid(gates[:, 0 * HIDDEN:1 * HIDDEN])
    f_g = jax.nn.sigmoid(gates[:, 1 * HIDDEN:2 * HIDDEN])
    g_g = jnp.tanh(gates[:, 2 * HIDDEN:3 * HIDDEN])
    o_g = jax.nn.sigmoid(gates[:, 3 * HIDDEN:4 * HIDDEN])
    cn = f_g * c2 + i_g * g_g
    hn = o_g * jnp.tanh(cn)
    logits = hn @ params["w_l"].T + params["b_l"]
    logp = jax.nn.log_softmax(logits, axis=-1)
    return logp.reshape(1, B, OUT), hn.reshape(1, B, HIDDEN), cn.reshape(1, B, HIDDEN)


if __name__ == "__main__":
    key = jax.random.PRNGKey(0)
    kx, kh, kc, kp = jax.random.split(key, 4)

    B = 8
    x = jax.random.normal(kx, (B, INPUT_SIZE), jnp.float32)
    h = jax.random.normal(kh, (1, B, HIDDEN), jnp.float32)
    c = jax.random.normal(kc, (1, B, HIDDEN), jnp.float32)
    params = init_params(kp)
    packed = pack_params(params)

    logp, hn, cn = lstm_forward(x, h, c, packed)
    jax.block_until_ready((logp, hn, cn))

    ref_logp, ref_hn, ref_cn = reference_forward(x, h, c, params)
    assert jnp.allclose(logp, ref_logp, atol=1e-5, rtol=1e-5)
    assert jnp.allclose(hn, ref_hn, atol=1e-5, rtol=1e-5)
    assert jnp.allclose(cn, ref_cn, atol=1e-5, rtol=1e-5)

    print("KERNEL_OK")
</pallas_src>

<mosaic_0001>
module attributes {stable_mosaic.version = 11 : i64} {
  func.func @lstm_kernel(%arg0: memref<8x256xf32, #tpu.memory_space<vmem>>, %arg1: memref<128x512xf32, #tpu.memory_space<vmem>>, %arg2: memref<1x512xf32, #tpu.memory_space<vmem>>, %arg3: memref<128x128xf32, #tpu.memory_space<vmem>>, %arg4: memref<8x384xf32, #tpu.memory_space<vmem>>) attributes {dimension_semantics = [], scalar_prefetch = 0 : i64, scratch_operands = 0 : i64, tpu.core_type = #tpu.core_type<tc>} {
    %c0 = arith.constant 0 : index
    %c0_0 = arith.constant 0 : index
    %0 = vector.load %arg0[%c0, %c0_0] : memref<8x256xf32, #tpu.memory_space<vmem>>, vector<8x256xf32>
    %1 = vector.extract_strided_slice %0 {offsets = [0, 0], sizes = [8, 128], strides = [1, 1]} : vector<8x256xf32> to vector<8x128xf32>
    %2 = vector.extract_strided_slice %0 {offsets = [0, 128], sizes = [8, 128], strides = [1, 1]} : vector<8x256xf32> to vector<8x128xf32>
    %c0_1 = arith.constant 0 : index
    %c0_2 = arith.constant 0 : index
    %3 = vector.load %arg1[%c0_1, %c0_2] : memref<128x512xf32, #tpu.memory_space<vmem>>, vector<128x512xf32>
    %cst = arith.constant dense<0.000000e+00> : vector<8x512xf32>
    %4 = tpu.matmul %1, %3, %cst {dimension_numbers = #tpu.dot_dimension_numbers<[1], [0], [0], [1], [0, 0, 1, 1], [], []>} : vector<8x128xf32>, vector<128x512xf32>, vector<8x512xf32> -> vector<8x512xf32>
    %c0_3 = arith.constant 0 : index
    %c0_4 = arith.constant 0 : index
    %5 = vector.load %arg2[%c0_3, %c0_4] : memref<1x512xf32, #tpu.memory_space<vmem>>, vector<1x512xf32>
    %6 = vector.broadcast %5 : vector<1x512xf32> to vector<8x512xf32>
    %7 = arith.addf %4, %6 : vector<8x512xf32>
    %8 = vector.extract_strided_slice %7 {offsets = [0, 0], sizes = [8, 128], strides = [1, 1]} : vector<8x512xf32> to vector<8x128xf32>
    %9 = arith.negf %8 : vector<8x128xf32>
    %10 = math.exp %9 : vector<8x128xf32>
    %cst_5 = arith.constant 1.000000e+00 : f32
    %11 = vector.broadcast %cst_5 : f32 to vector<8x128xf32>
    %12 = arith.addf %11, %10 : vector<8x128xf32>
    %13 = arith.divf %11, %12 : vector<8x128xf32>
    %14 = vector.extract_strided_slice %7 {offsets = [0, 128], sizes = [8, 128], strides = [1, 1]} : vector<8x512xf32> to vector<8x128xf32>
    %15 = arith.negf %14 : vector<8x128xf32>
    %16 = math.exp %15 : vector<8x128xf32>
    %cst_6 = arith.constant 1.000000e+00 : f32
    %17 = vector.broadcast %cst_6 : f32 to vector<8x128xf32>
    %18 = arith.addf %17, %16 : vector<8x128xf32>
    %19 = arith.divf %17, %18 : vector<8x128xf32>
    %20 = vector.extract_strided_slice %7 {offsets = [0, 256], sizes = [8, 128], strides = [1, 1]} : vector<8x512xf32> to vector<8x128xf32>
    %21 = math.tanh %20 : vector<8x128xf32>
    %22 = vector.extract_strided_slice %7 {offsets = [0, 384], sizes = [8, 128], strides = [1, 1]} : vector<8x512xf32> to vector<8x128xf32>
    %23 = arith.negf %22 : vector<8x128xf32>
    %24 = math.exp %23 : vector<8x128xf32>
    %cst_7 = arith.constant 1.000000e+00 : f32
    %25 = vector.broadcast %cst_7 : f32 to vector<8x128xf32>
    %26 = arith.addf %25, %24 : vector<8x128xf32>
    %27 = arith.divf %25, %26 : vector<8x128xf32>
    %28 = arith.mulf %19, %2 : vector<8x128xf32>
    %29 = arith.mulf %13, %21 : vector<8x128xf32>
    %30 = arith.addf %28, %29 : vector<8x128xf32>
    %31 = math.tanh %30 : vector<8x128xf32>
    %32 = arith.mulf %27, %31 : vector<8x128xf32>
    %33 = tpu.iota {dimensions = array<i32: 1>} : vector<8x128xi32>
    %c64_i32 = arith.constant 64 : i32
    %34 = vector.broadcast %c64_i32 : i32 to vector<8x128xi32>
    %35 = arith.cmpi eq, %33, %34 : vector<8x128xi32>
    %cst_8 = arith.constant 1.000000e+00 : f32
    %36 = vector.broadcast %cst_8 : f32 to vector<8x128xf32>
    %37 = arith.select %35, %36, %32 : vector<8x128xi1>, vector<8x128xf32>
    %c0_9 = arith.constant 0 : index
    %c0_10 = arith.constant 0 : index
    %38 = vector.load %arg3[%c0_9, %c0_10] : memref<128x128xf32, #tpu.memory_space<vmem>>, vector<128x128xf32>
    %cst_11 = arith.constant dense<0.000000e+00> : vector<8x128xf32>
    %39 = tpu.matmul %37, %38, %cst_11 {dimension_numbers = #tpu.dot_dimension_numbers<[1], [0], [0], [1], [0, 0, 1, 1], [], []>} : vector<8x128xf32>, vector<128x128xf32>, vector<8x128xf32> -> vector<8x128xf32>
    %c18_i32 = arith.constant 18 : i32
    %40 = vector.broadcast %c18_i32 : i32 to vector<8x128xi32>
    %41 = arith.cmpi slt, %33, %40 : vector<8x128xi32>
    %cst_12 = arith.constant -1.000000e+30 : f32
    %42 = vector.broadcast %cst_12 : f32 to vector<8x128xf32>
    %43 = arith.select %41, %39, %42 : vector<8x128xi1>, vector<8x128xf32>
    %cst_13 = arith.constant dense<0xFF800000> : vector<8xf32>
    %44 = vector.multi_reduction <maximumf>, %43, %cst_13 [1] : vector<8x128xf32> to vector<8xf32>
    %45 = vector.shape_cast %44 : vector<8xf32> to vector<8x1xf32>
    %46 = vector.broadcast %45 : vector<8x1xf32> to vector<8x128xf32>
    %47 = arith.subf %43, %46 : vector<8x128xf32>
    %48 = math.exp %47 : vector<8x128xf32>
    %cst_14 = arith.constant dense<0.000000e+00> : vector<8xf32>
    %49 = vector.multi_reduction <add>, %48, %cst_14 [1] : vector<8x128xf32> to vector<8xf32>
    %50 = vector.shape_cast %49 : vector<8xf32> to vector<8x1xf32>
    %51 = math.log %50 : vector<8x1xf32>
    %52 = arith.addf %45, %51 : vector<8x1xf32>
    %53 = vector.broadcast %52 : vector<8x1xf32> to vector<8x128xf32>
    %54 = arith.subf %43, %53 : vector<8x128xf32>
    %c0_15 = arith.constant 0 : index
    %c0_16 = arith.constant 0 : index
    %55 = vector.load %arg4[%c0_15, %c0_16] : memref<8x384xf32, #tpu.memory_space<vmem>>, vector<8x128xf32>
    tpu.vector_store %arg4[%c0_15, %c0_16], %32 {strides = array<i32>} : memref<8x384xf32, #tpu.memory_space<vmem>>, vector<8x128xf32>,
    %c0_17 = arith.constant 0 : index
    %c128 = arith.constant 128 : index
    %56 = vector.load %arg4[%c0_17, %c128] : memref<8x384xf32, #tpu.memory_space<vmem>>, vector<8x128xf32>
    tpu.vector_store %arg4[%c0_17, %c128], %30 {strides = array<i32>} : memref<8x384xf32, #tpu.memory_space<vmem>>, vector<8x128xf32>,
    %c0_18 = arith.constant 0 : index
    %c256 = arith.constant 256 : index
    %57 = vector.load %arg4[%c0_18, %c256] : memref<8x384xf32, #tpu.memory_space<vmem>>, vector<8x128xf32>
    tpu.vector_store %arg4[%c0_18, %c256], %54 {strides = array<i32>} : memref<8x384xf32, #tpu.memory_space<vmem>>, vector<8x128xf32>,
    return
  }
}

</mosaic_0001>

<llo_original>
// kernel: lstm_forward.1
$region0: #{lstm_forward.1}
  #allocation0 [shape = 'u32[]', space=smem, size = 0x4, offset = 0x4, fixed_abs, tag = 'smem constant byte address 0x4 - core index']
  #allocation1 [shape = 'u32[72,128]{1,0:T(1,128)}', space=vmem, size = 0x9000, scoped, tag = 'internal scratch']
  %s0 = inlined_call_operand.vmem [shape: f32[8,256], index: 0, kind: input, shape index: {}]
  %s1 = inlined_call_operand.hbm [shape: f32[128,512], index: 1, kind: input, shape index: {}]
  %s2 = inlined_call_operand.vmem [shape: f32[1,512], index: 2, kind: input, shape index: {}]
  %s3 = inlined_call_operand.hbm [shape: f32[128,128], index: 3, kind: input, shape index: {}]
  %s4 = inlined_call_operand.vmem [shape: f32[8,384], index: 4, kind: output, shape index: {}]
  %s5 = sld [smem:[#allocation0]]
  $region34: #{lstm_forward.1} parent=0
    _
  %s7 = ssub.s32 1, %s5
  %s8 = scalar_select 0, %s7, %s5
  $region1: #{lstm_forward.1} parent=0
    #allocation2 [shape = 'u8[262144]{0}', space=vmem, size = 0x40000, scoped, tag = 'input window, operand 1, single buffered']
    #allocation3 [shape = 's32[1]{0}', space=sflag, size = 0x4, scoped, tag = 'scoped memory for lstm_forward.1']
    #allocation4 [shape = 'u8[65536]{0}', space=vmem, size = 0x10000, scoped, tag = 'input window, operand 3, single buffered']
    #allocation5 [shape = 's32[1]{0}', space=sflag, size = 0x4, scoped, tag = 'scoped memory for lstm_forward.1']
    %9 = vsyncpa [#allocation3], 0
    %10 = vsyncpa [#allocation5], 0
    // Predicated region
    $region2: #{lstm_forward.1} parent=1 // pred_check
      _
    $region3: #{lstm_forward.1} parent=1 // pred_check_branch
      %12 = sbr.rel (0) target = $region5
    $region4: #{lstm_forward.1} parent=1 // pred_region
      _
    $region5: #{lstm_forward.1} parent=1 // pred_fallthru
      _
    // Predicated region
    $region6: #{lstm_forward.1} parent=1 // pred_check
      _
    $region7: #{lstm_forward.1} parent=1 // pred_check_branch
      %14 = sbr.rel (0) target = $region9
    $region8: #{lstm_forward.1} parent=1 // pred_region
      %16 = vsyncadd [#allocation3], 0
      %s17 = sshll.u32 %s1, 4
      %s18 = int_to_ptr.hbm [resolvable:$true] %s17
      %s19 = sshll.u32 [#allocation2], 4
      %s20 = int_to_ptr.vmem [resolvable:$true] %s19
      %25 = dma.hbm_to_vmem [thread:$0]  %s18, 8192, %s20, [#allocation3], 512, 512, 32
    $region9: #{lstm_forward.1} parent=1 // pred_fallthru
      _
    // Predicated region
    $region10: #{lstm_forward.1} parent=1 // pred_check
      _
    $region11: #{lstm_forward.1} parent=1 // pred_check_branch
      %27 = sbr.rel (0) target = $region13
    $region12: #{lstm_forward.1} parent=1 // pred_region
      _
    $region13: #{lstm_forward.1} parent=1 // pred_fallthru
      _
    // Predicated region
    $region14: #{lstm_forward.1} parent=1 // pred_check
      _
    $region15: #{lstm_forward.1} parent=1 // pred_check_branch
      %29 = sbr.rel (0) target = $region17
    $region16: #{lstm_forward.1} parent=1 // pred_region
      %31 = vsyncadd [#allocation5], 0
      %s32 = sshll.u32 %s3, 4
      %s33 = int_to_ptr.hbm [resolvable:$true] %s32
      %s34 = sshll.u32 [#allocation4], 4
      %s35 = int_to_ptr.vmem [resolvable:$true] %s34
      %40 = dma.hbm_to_vmem [thread:$0]  %s33, 2048, %s35, [#allocation5], 128, 128, 8
    $region17: #{lstm_forward.1} parent=1 // pred_fallthru
      _
    // Predicated region
    $region18: #{lstm_forward.1} parent=1 // pred_check
      _
    $region19: #{lstm_forward.1} parent=1 // pred_check_branch
      %42 = sbr.rel (0) target = $region21
    $region20: #{lstm_forward.1} parent=1 // pred_region
      %44 = dma.done [#allocation3], 8192
    $region21: #{lstm_forward.1} parent=1 // pred_fallthru
      _
    // Predicated region
    $region22: #{lstm_forward.1} parent=1 // pred_check
      _
    $region23: #{lstm_forward.1} parent=1 // pred_check_branch
      %46 = sbr.rel (0) target = $region25
    $region24: #{lstm_forward.1} parent=1 // pred_region
      %48 = dma.done [#allocation5], 2048
    $region25: #{lstm_forward.1} parent=1 // pred_fallthru
      _
    %v49 = vld [vmem:[%s0] sm:$0xff]
    %v50 = vld [vmem:[%s0 + $0x8] sm:$0xff]
    %v51 = vld [vmem:[#allocation2] sm:$0xff]
    %v52 = vld [vmem:[#allocation2 + $0x8] sm:$0xff]
    %v53 = vld [vmem:[#allocation2 + $0x10] sm:$0xff]
    %v54 = vld [vmem:[#allocation2 + $0x18] sm:$0xff]
    %v55 = vld [vmem:[#allocation2 + $0x20] sm:$0xff]
    %v56 = vld [vmem:[#allocation2 + $0x28] sm:$0xff]
    %v57 = vld [vmem:[#allocation2 + $0x30] sm:$0xff]
    %v58 = vld [vmem:[#allocation2 + $0x38] sm:$0xff]
    %v59 = vld [vmem:[#allocation2 + $0x40] sm:$0xff]
    %v60 = vld [vmem:[#allocation2 + $0x48] sm:$0xff]
    %v61 = vld [vmem:[#allocation2 + $0x50] sm:$0xff]
    %v62 = vld [vmem:[#allocation2 + $0x58] sm:$0xff]
    %v63 = vld [vmem:[#allocation2 + $0x60] sm:$0xff]
    %v64 = vld [vmem:[#allocation2 + $0x68] sm:$0xff]
    %v65 = vld [vmem:[#allocation2 + $0x70] sm:$0xff]
    %v66 = vld [vmem:[#allocation2 + $0x78] sm:$0xff]
    %v67 = vld [vmem:[#allocation2 + $0x80] sm:$0xff]
    %v68 = vld [vmem:[#allocation2 + $0x88] sm:$0xff]
    %v69 = vld [vmem:[#allocation2 + $0x90] sm:$0xff]
    %v70 = vld [vmem:[#allocation2 + $0x98] sm:$0xff]
    %v71 = vld [vmem:[#allocation2 + $0xa0] sm:$0xff]
    %v72 = vld [vmem:[#allocation2 + $0xa8] sm:$0xff]
    %v73 = vld [vmem:[#allocation2 + $0xb0] sm:$0xff]
    %v74 = vld [vmem:[#allocation2 + $0xb8] sm:$0xff]
    %v75 = vld [vmem:[#allocation2 + $0xc0] sm:$0xff]
    %v76 = vld [vmem:[#allocation2 + $0xc8] sm:$0xff]
    %v77 = vld [vmem:[#allocation2 + $0xd0] sm:$0xff]
    %v78 = vld [vmem:[#allocation2 + $0xd8] sm:$0xff]
    %v79 = vld [vmem:[#allocation2 + $0xe0] sm:$0xff]
    %v80 = vld [vmem:[#allocation2 + $0xe8] sm:$0xff]
    %v81 = vld [vmem:[#allocation2 + $0xf0] sm:$0xff]
    %v82 = vld [vmem:[#allocation2 + $0xf8] sm:$0xff]
    %v83 = vld [vmem:[#allocation2 + $0x100] sm:$0xff]
    %v84 = vld [vmem:[#allocation2 + $0x108] sm:$0xff]
    %v85 = vld [vmem:[#allocation2 + $0x110] sm:$0xff]
    %v86 = vld [vmem:[#allocation2 + $0x118] sm:$0xff]
    %v87 = vld [vmem:[#allocation2 + $0x120] sm:$0xff]
    %v88 = vld [vmem:[#allocation2 + $0x128] sm:$0xff]
    %v89 = vld [vmem:[#allocation2 + $0x130] sm:$0xff]
    %v90 = vld [vmem:[#allocation2 + $0x138] sm:$0xff]
    %v91 = vld [vmem:[#allocation2 + $0x140] sm:$0xff]
    %v92 = vld [vmem:[#allocation2 + $0x148] sm:$0xff]
    %v93 = vld [vmem:[#allocation2 + $0x150] sm:$0xff]
    %v94 = vld [vmem:[#allocation2 + $0x158] sm:$0xff]
    %v95 = vld [vmem:[#allocation2 + $0x160] sm:$0xff]
    %v96 = vld [vmem:[#allocation2 + $0x168] sm:$0xff]
    %v97 = vld [vmem:[#allocation2 + $0x170] sm:$0xff]
    %v98 = vld [vmem:[#allocation2 + $0x178] sm:$0xff]
    %v99 = vld [vmem:[#allocation2 + $0x180] sm:$0xff]
    %v100 = vld [vmem:[#allocation2 + $0x188] sm:$0xff]
    %v101 = vld [vmem:[#allocation2 + $0x190] sm:$0xff]
    %v102 = vld [vmem:[#allocation2 + $0x198] sm:$0xff]
    %v103 = vld [vmem:[#allocation2 + $0x1a0] sm:$0xff]
    %v104 = vld [vmem:[#allocation2 + $0x1a8] sm:$0xff]
    %v105 = vld [vmem:[#allocation2 + $0x1b0] sm:$0xff]
    %v106 = vld [vmem:[#allocation2 + $0x1b8] sm:$0xff]
    %v107 = vld [vmem:[#allocation2 + $0x1c0] sm:$0xff]
    %v108 = vld [vmem:[#allocation2 + $0x1c8] sm:$0xff]
    %v109 = vld [vmem:[#allocation2 + $0x1d0] sm:$0xff]
    %v110 = vld [vmem:[#allocation2 + $0x1d8] sm:$0xff]
    %v111 = vld [vmem:[#allocation2 + $0x1e0] sm:$0xff]
    %v112 = vld [vmem:[#allocation2 + $0x1e8] sm:$0xff]
    %v113 = vld [vmem:[#allocation2 + $0x1f0] sm:$0xff]
    %v114 = vld [vmem:[#allocation2 + $0x1f8] sm:$0xff]
    %v115 = vld [vmem:[%s2] sm:$0xf]
    %v117 = vperm.slane %v115, 0
    %v118 = vperm.slane %v115, 1
    %v119 = vperm.slane %v115, 2
    %v120 = vperm.slane %v115, 3
    %125 = vmatpush.msra.mxu0 %v111
    %126 = vmatpush.msra.mxu0 %v107
    %127 = vmatpush.msra.mxu0 %v103
    %128 = vmatpush.msra.mxu0 %v99
    %129 = vmatpush.msra.mxu0 %v95
    %130 = vmatpush.msra.mxu0 %v91
    %131 = vmatpush.msra.mxu0 %v87
    %132 = vmatpush.msra.mxu0 %v83
    %133 = vmatpush.msra.mxu0 %v79
    %134 = vmatpush.msra.mxu0 %v75
    %135 = vmatpush.msra.mxu0 %v71
    %136 = vmatpush.msra.mxu0 %v67
    %137 = vmatpush.msra.mxu0 %v63
    %138 = vmatpush.msra.mxu0 %v59
    %139 = vmatpush.msra.mxu0 %v55
    %140 = vmatpush.msra.mxu0 %v51
    %141 = vmatmul.f32.gmra.mxu0 %v49
    %v142 = vpop.f32.mrf.mxu0
    %v143 = vadd.f32 %v117, %v142
    %144 = vdwg.mxu0
    %145 = vmatpush.msra.mxu0 %v112
    %146 = vmatpush.msra.mxu0 %v108
    %147 = vmatpush.msra.mxu0 %v104
    %148 = vmatpush.msra.mxu0 %v100
    %149 = vmatpush.msra.mxu0 %v96
    %150 = vmatpush.msra.mxu0 %v92
    %151 = vmatpush.msra.mxu0 %v88
    %152 = vmatpush.msra.mxu0 %v84
    %153 = vmatpush.msra.mxu0 %v80
    %154 = vmatpush.msra.mxu0 %v76
    %155 = vmatpush.msra.mxu0 %v72
    %156 = vmatpush.msra.mxu0 %v68
    %157 = vmatpush.msra.mxu0 %v64
    %158 = vmatpush.msra.mxu0 %v60
    %159 = vmatpush.msra.mxu0 %v56
    %160 = vmatpush.msra.mxu0 %v52
    %161 = vmatmul.f32.gmra.mxu0 %v49
    %v162 = vpop.f32.mrf.mxu0
    %v163 = vadd.f32 %v118, %v162
    %164 = vdwg.mxu0
    %165 = vmatpush.msra.mxu0 %v113
    %166 = vmatpush.msra.mxu0 %v109
    %167 = vmatpush.msra.mxu0 %v105
    %168 = vmatpush.msra.mxu0 %v101
    %169 = vmatpush.msra.mxu0 %v97
    %170 = vmatpush.msra.mxu0 %v93
    %171 = vmatpush.msra.mxu0 %v89
    %172 = vmatpush.msra.mxu0 %v85
    %173 = vmatpush.msra.mxu0 %v81
    %174 = vmatpush.msra.mxu0 %v77
    %175 = vmatpush.msra.mxu0 %v73
    %176 = vmatpush.msra.mxu0 %v69
    %177 = vmatpush.msra.mxu0 %v65
    %178 = vmatpush.msra.mxu0 %v61
    %179 = vmatpush.msra.mxu0 %v57
    %180 = vmatpush.msra.mxu0 %v53
    %181 = vmatmul.f32.gmra.mxu0 %v49
    %v182 = vpop.f32.mrf.mxu0
    %v183 = vadd.f32 %v119, %v182
    %184 = vdwg.mxu0
    %185 = vmatpush.msra.mxu0 %v114
    %186 = vmatpush.msra.mxu0 %v110
    %187 = vmatpush.msra.mxu0 %v106
    %188 = vmatpush.msra.mxu0 %v102
    %189 = vmatpush.msra.mxu0 %v98
    %190 = vmatpush.msra.mxu0 %v94
    %191 = vmatpush.msra.mxu0 %v90
    %192 = vmatpush.msra.mxu0 %v86
    %193 = vmatpush.msra.mxu0 %v82
    %194 = vmatpush.msra.mxu0 %v78
    %195 = vmatpush.msra.mxu0 %v74
    %196 = vmatpush.msra.mxu0 %v70
    %197 = vmatpush.msra.mxu0 %v66
    %198 = vmatpush.msra.mxu0 %v62
    %199 = vmatpush.msra.mxu0 %v58
    %200 = vmatpush.msra.mxu0 %v54
    %201 = vmatmul.f32.gmra.mxu0 %v49
    %v202 = vpop.f32.mrf.mxu0
    %v203 = vadd.f32 %v120, %v202
    %204 = vdwg.mxu0
    %v205 = vxor.u32 %v143, 2147483648
    %v206 = vmul.f32 %v205, 1.442695
    %v207 = vpow.pop %v206
    %v208 = vadd.f32 %v207, 1.0
    %v209 = vrcp.pop %v208
    %v210 = vmul.f32 %v208, %v209
    %v211 = vsub.f32 1.0, %v210
    %v212 = vmul.f32 %v209, %v211
    %v213 = vadd.f32 %v209, %v212
    %vm214 = vweird.f32 %v208
    %vm215 = vweird.f32 %v209
    %vm216 = vmor %vm214, %vm215
    %v217 = vsel %vm216, %v209, %v213
    %v218 = vand.u32 2147483647, %v208
    %vm219 = vcmp.eq.f32.partialorder %v218, 8.507059e+37
    %v220 = vand.u32 %v208, 2147483648
    %v221 = vor.u32 1.1754944e-38, %v220
    %v222 = vsel %vm219, %v221, %v217
    %v223 = vmul.f32 1.0, %v222
    %v224 = vxor.u32 %v163, 2147483648
    %v225 = vmul.f32 %v224, 1.442695
    %v226 = vpow.pop %v225
    %v227 = vadd.f32 %v226, 1.0
    %v228 = vrcp.pop %v227
    %v229 = vmul.f32 %v227, %v228
    %v230 = vsub.f32 1.0, %v229
    %v231 = vmul.f32 %v228, %v230
    %v232 = vadd.f32 %v228, %v231
    %vm233 = vweird.f32 %v227
    %vm234 = vweird.f32 %v228
    %vm235 = vmor %vm233, %vm234
    %v236 = vsel %vm235, %v228, %v232
    %v237 = vand.u32 2147483647, %v227
    %vm238 = vcmp.eq.f32.partialorder %v237, 8.507059e+37
    %v239 = vand.u32 %v227, 2147483648
    %v240 = vor.u32 1.1754944e-38, %v239
    %v241 = vsel %vm238, %v240, %v236
    %v242 = vmul.f32 1.0, %v241
    %v243 = vtanh.pop %v183
    %v244 = vxor.u32 %v203, 2147483648
    %v245 = vmul.f32 %v244, 1.442695
    %v246 = vpow.pop %v245
    %v247 = vadd.f32 %v246, 1.0
    %v248 = vrcp.pop %v247
    %v249 = vmul.f32 %v247, %v248
    %v250 = vsub.f32 1.0, %v249
    %v251 = vmul.f32 %v248, %v250
    %v252 = vadd.f32 %v248, %v251
    %vm253 = vweird.f32 %v247
    %vm254 = vweird.f32 %v248
    %vm255 = vmor %vm253, %vm254
    %v256 = vsel %vm255, %v248, %v252
    %v257 = vand.u32 2147483647, %v247
    %vm258 = vcmp.eq.f32.partialorder %v257, 8.507059e+37
    %v259 = vand.u32 %v247, 2147483648
    %v260 = vor.u32 1.1754944e-38, %v259
    %v261 = vsel %vm258, %v260, %v256
    %v262 = vmul.f32 1.0, %v261
    %v263 = vmul.f32 %v242, %v50
    %v264 = vmul.f32 %v223, %v243
    %v265 = vadd.f32 %v263, %v264
    %v266 = vtanh.pop %v265
    %v267 = vmul.f32 %v262, %v266
    %v268 = vlaneseq
    %v269 = vand.u32 %v268, 127
    %vm270 = vcmp.eq.s32.totalorder %v269, 64
    %v271 = vsel %vm270, 1.0, %v267
    %v272 = vld [vmem:[#allocation4] sm:$0xff]
    %v273 = vld [vmem:[#allocation4 + $0x8] sm:$0xff]
    %v274 = vld [vmem:[#allocation4 + $0x10] sm:$0xff]
    %v275 = vld [vmem:[#allocation4 + $0x18] sm:$0xff]
    %v276 = vld [vmem:[#allocation4 + $0x20] sm:$0xff]
    %v277 = vld [vmem:[#allocation4 + $0x28] sm:$0xff]
    %v278 = vld [vmem:[#allocation4 + $0x30] sm:$0xff]
    %v279 = vld [vmem:[#allocation4 + $0x38] sm:$0xff]
    %v280 = vld [vmem:[#allocation4 + $0x40] sm:$0xff]
    %v281 = vld [vmem:[#allocation4 + $0x48] sm:$0xff]
    %v282 = vld [vmem:[#allocation4 + $0x50] sm:$0xff]
    %v283 = vld [vmem:[#allocation4 + $0x58] sm:$0xff]
    %v284 = vld [vmem:[#allocation4 + $0x60] sm:$0xff]
    %v285 = vld [vmem:[#allocation4 + $0x68] sm:$0xff]
    %v286 = vld [vmem:[#allocation4 + $0x70] sm:$0xff]
    %v287 = vld [vmem:[#allocation4 + $0x78] sm:$0xff]
    %288 = vmatpush.msra.mxu0 %v287
    %289 = vmatpush.msra.mxu0 %v286
    %290 = vmatpush.msra.mxu0 %v285
    %291 = vmatpush.msra.mxu0 %v284
    %292 = vmatpush.msra.mxu0 %v283
    %293 = vmatpush.msra.mxu0 %v282
    %294 = vmatpush.msra.mxu0 %v281
    %295 = vmatpush.msra.mxu0 %v280
    %296 = vmatpush.msra.mxu0 %v279
    %297 = vmatpush.msra.mxu0 %v278
    %298 = vmatpush.msra.mxu0 %v277
    %299 = vmatpush.msra.mxu0 %v276
    %300 = vmatpush.msra.mxu0 %v275
    %301 = vmatpush.msra.mxu0 %v274
    %302 = vmatpush.msra.mxu0 %v273
    %303 = vmatpush.msra.mxu0 %v272
    %304 = vmatmul.f32.gmra.mxu0 %v271
    %v305 = vpop.f32.mrf.mxu0
    %v306 = vadd.f32 0.0, %v305
    %307 = vdwg.mxu0
    %vm308 = vcmp.lt.s32.totalorder %v269, 18
    %v309 = vsel %vm308, %v306, -1e+30
    %310 = vmax.xlane.f32.xlu0 %v309
    %v311 = vpop.xlane.xlu0 %310
    %v312 = vsub.f32 %v309, %v311
    %v313 = vmul.f32 %v312, 1.442695
    %v314 = vpow.pop %v313
    %315 = vadd.xlane.f32.xlu0 %v314
    %v316 = vpop.xlane.xlu0 %315
    %v317 = vlog2.pop %v316
    %v318 = vmul.f32 %v317, 0.6931472
    %v319 = vadd.f32 %v311, %v318
    %v320 = vsub.f32 %v309, %v319
    %321 = vst [vmem:[%s4] sm:$0xff] %v267
    %322 = vst [vmem:[%s4 + $0x8] sm:$0xff] %v265
    %323 = vst [vmem:[%s4 + $0x10] sm:$0xff] %v320
    // Predicated region
    $region26: #{lstm_forward.1} parent=1 // pred_check
      _
    $region27: #{lstm_forward.1} parent=1 // pred_check_branch
      %325 = sbr.rel (0) target = $region29
    $region28: #{lstm_forward.1} parent=1 // pred_region
      _
    $region29: #{lstm_forward.1} parent=1 // pred_fallthru
      _
    // Predicated region
    $region30: #{lstm_forward.1} parent=1 // pred_check
      _
    $region31: #{lstm_forward.1} parent=1 // pred_check_branch
      %327 = sbr.rel (0) target = $region33
    $region32: #{lstm_forward.1} parent=1 // pred_region
      _
    $region33: #{lstm_forward.1} parent=1 // pred_fallthru
      _
    %328 = vsyncpa [#allocation3], 1
    %329 = vsyncpa [#allocation5], 1

</llo_original>
